<compile_context>
chip_gen: v7x
topology: tpu7x:2x2x1
jax: 0.10.0
libtpu: 0.0.40
codegen_flags: <defaults>
</compile_context>

<pallas_src>
import functools

import jax
import jax.numpy as jnp
import numpy as np
from jax.experimental import pallas as pl
from jax.experimental.pallas import tpu as pltpu


def _round_up(x, m):
    return (x + m - 1) // m * m


def _fused_dwconv_bn_elu_pw_kernel(x_ref, mask_ref, dw_ref, pw_ref, out_ref, *,
                                   kernel_size, c_in, w_out, n_valid, eps):
    """x_ref:   (C_in, W_in)    circularly pre-padded, batch-folded, zero-padded
                                so W_in >= W_out + K - 1 lanes.
       mask_ref:(1, W_out)      1.0 on real output lanes, 0.0 on junk lanes.
       dw_ref:  (C_in, K+2)     [w_dw | gamma | beta]  (depthwise bias dropped).
       pw_ref:  (C_out, C_in+1) [w_pw | b_pw].
       out_ref: (C_out, W_out)  lane-dense slab; output (b, t) lives at lane
                                b*(L+2p) + t*stride (cropped in the wrapper)."""
    x2 = x_ref[...].astype(jnp.float32)               # (C_in, W_in)
    mask = mask_ref[...].astype(jnp.float32)           # (1, W_out)
    dwp = dw_ref[...].astype(jnp.float32)              # (C_in, K+2)
    pwp = pw_ref[...].astype(jnp.float32)               # (C_out, C_in+1)

    # --- depthwise conv (groups=C_in): K slab-wide FMAs over all batches ---
    # Each tap is one static lane-offset slice of the whole padded slab, and
    # each (C_in,1) tap weight is broadcast exactly once.
    y = None
    for j in range(kernel_size):
        term = x2[:, j:j + w_out] * dwp[:, j:j + 1]     # (C_in, W_out)
        y = term if y is None else y + term
    # NOTE: depthwise bias is a per-channel constant and cancels exactly under
    # training-mode BatchNorm (mean subtraction) -> never added, never DMA'd.

    # Zero non-output lanes once (circular-pad columns + 128-alignment pad) so
    # they contribute nothing to BN stats and stay finite downstream.
    y = y * mask

    # --- BatchNorm1d, training-mode forward, single-pass biased stats ------
    # TODO(synk): running_mean/running_var/num_batches_tracked buffer updates
    # (module state) are not produced; only the normalized forward output is.
    inv_n = 1.0 / float(n_valid)
    s1 = jnp.sum(y, axis=1, keepdims=True)              # (C_in, 1)
    s2 = jnp.sum(y * y, axis=1, keepdims=True)          # (C_in, 1)
    mean = s1 * inv_n
    var = s2 * inv_n - mean * mean                      # fine at these scales
    gamma = dwp[:, kernel_size:kernel_size + 1]
    beta = dwp[:, kernel_size + 1:kernel_size + 2]
    scale = gamma * jax.lax.rsqrt(var + eps)
    shift = beta - mean * scale
    y = y * scale + shift                               # one fused scale+shift

    # --- ELU (alpha = 1); exp goes to the EUP slot --------------------------
    y = jnp.where(y > 0, y, jnp.exp(jnp.minimum(y, 0.0)) - 1.0)

    # --- pointwise (1x1) conv on the MXU over the whole lane-dense slab -----
    acc = jnp.dot(pwp[:, :c_in], y, preferred_element_type=jnp.float32)
    out_ref[...] = (acc + pwp[:, c_in:c_in + 1]).astype(out_ref.dtype)


def depthwise_conv1d_forward(x, params, *, kernel_size, padding, stride, eps=1e-5):
    """x: (B, C_in, L) float32. params = (w_dw, b_dw, gamma, beta, w_pw, b_pw).

    Matches the PyTorch module's forward (training-mode BatchNorm)."""
    B, C_in, L = x.shape
    w_dw, b_dw, gamma, beta, w_pw, b_pw = params
    del b_dw  # cancels exactly under training-mode BatchNorm
    C_out = w_pw.shape[0]
    assert padding <= L, "circular padding requires padding <= length"
    L_out = (L + 2 * padding - kernel_size) // stride + 1
    P = L + 2 * padding                                  # per-batch padded period

    # One vectorized circular pad across ALL batches (single XLA concat).
    if padding > 0:
        xpad = jnp.concatenate(
            [x[:, :, L - padding:], x, x[:, :, :padding]], axis=-1)  # (B,C,P)
    else:
        xpad = x

    # Lane-dense, batch-folded slab (C_in, B*P), zero-padded so the output
    # store is a full 128-multiple and tap slices stay in bounds.
    # TODO(synk): at realistic sizes fold this transpose/pad into the x
    # BlockSpec (grid over B) instead of a wrapper-side XLA transpose.
    x2 = jnp.transpose(xpad, (1, 0, 2)).reshape(C_in, B * P)
    W_out = _round_up(B * P, 128)
    W_in = W_out + (_round_up(kernel_size - 1, 128) if kernel_size > 1 else 0)
    x_slab = jnp.pad(x2, ((0, 0), (0, W_in - B * P)))

    # Static 0/1 mask of real output lanes: output (b, t) sits at lane
    # b*P + t*stride; circular-pad columns / alignment padding are junk.
    lane = np.arange(W_out)
    q = lane % P
    valid = (lane < B * P) & (q <= (L_out - 1) * stride) & (q % stride == 0)
    mask = jnp.asarray(valid.astype(np.float32))[None, :]        # (1, W_out)

    # Pack the tiny per-channel parameters into two operands.
    dw_params = jnp.concatenate(
        [w_dw, gamma[:, None], beta[:, None]], axis=1)           # (C_in, K+2)
    pw_params = jnp.concatenate([w_pw, b_pw[:, None]], axis=1)   # (C_out, C_in+1)

    kernel = functools.partial(
        _fused_dwconv_bn_elu_pw_kernel,
        kernel_size=kernel_size, c_in=C_in, w_out=W_out,
        n_valid=B * L_out, eps=eps)

    vmem = pl.BlockSpec(memory_space=pltpu.MemorySpace.VMEM)
    out2 = pl.pallas_call(
        kernel,
        out_shape=jax.ShapeDtypeStruct((C_out, W_out), jnp.float32),
        in_specs=[vmem, vmem, vmem, vmem],
        out_specs=vmem,
    )(x_slab, mask, dw_params, pw_params)

    # Crop the lane-dense slab back to (B, C_out, L_out).
    out3 = out2[:, :B * P].reshape(C_out, B, P)
    out3 = out3[:, :, : (L_out - 1) * stride + 1 : stride]       # (C_out,B,L_out)
    return jnp.transpose(out3, (1, 0, 2))


def reference_forward(x, params, *, kernel_size, padding, stride, eps=1e-5):
    """Pure-JAX reference matching the PyTorch forward (training-mode BN)."""
    w_dw, b_dw, gamma, beta, w_pw, b_pw = params
    B, C, L = x.shape
    L_out = (L + 2 * padding - kernel_size) // stride + 1
    xp = (jnp.concatenate([x[:, :, L - padding:], x, x[:, :, :padding]], -1)
          if padding > 0 else x)
    y = jnp.zeros((B, C, L_out), jnp.float32)
    for j in range(kernel_size):
        tap = xp[:, :, j: j + stride * (L_out - 1) + 1: stride]
        y = y + tap * w_dw[:, j][None, :, None]
    y = y + b_dw[None, :, None]
    mean = y.mean(axis=(0, 2), keepdims=True)
    var = ((y - mean) ** 2).mean(axis=(0, 2), keepdims=True)
    y = (y - mean) / jnp.sqrt(var + eps) * gamma[None, :, None] + beta[None, :, None]
    y = jnp.where(y > 0, y, jnp.exp(jnp.minimum(y, 0.0)) - 1.0)
    out = jnp.einsum('oc,bcl->bol', w_pw, y) + b_pw[None, :, None]
    return out


if __name__ == "__main__":
    # Small shapes consistent with the module: dim_in=4, dim_out=8, length=16.
    B, C_in, C_out, L = 2, 4, 8, 16
    kernel_size, padding, stride = 3, 1, 1

    key = jax.random.PRNGKey(0)
    ks = jax.random.split(key, 7)
    x = jax.random.normal(ks[0], (B, C_in, L), jnp.float32)

    # Deterministic synthetic parameter init (shapes from __init__).
    w_dw = 0.5 * jax.random.normal(ks[1], (C_in, kernel_size), jnp.float32)
    b_dw = 0.1 * jax.random.normal(ks[2], (C_in,), jnp.float32)
    gamma = 1.0 + 0.1 * jax.random.normal(ks[3], (C_in,), jnp.float32)
    beta = 0.1 * jax.random.normal(ks[4], (C_in,), jnp.float32)
    w_pw = 0.5 * jax.random.normal(ks[5], (C_out, C_in), jnp.float32)
    b_pw = 0.1 * jax.random.normal(ks[6], (C_out,), jnp.float32)
    params = (w_dw, b_dw, gamma, beta, w_pw, b_pw)

    out = depthwise_conv1d_forward(
        x, params, kernel_size=kernel_size, padding=padding, stride=stride)
    out = jax.block_until_ready(out)

    ref = reference_forward(
        x, params, kernel_size=kernel_size, padding=padding, stride=stride)
    L_out = (L + 2 * padding - kernel_size) // stride + 1
    assert out.shape == (B, C_out, L_out)
    assert np.allclose(np.asarray(out), np.asarray(ref), atol=1e-3, rtol=1e-3)

    print("KERNEL_OK")
</pallas_src>

<mosaic_0001>
module attributes {stable_mosaic.version = 11 : i64} {
  func.func @_fused_dwconv_bn_elu_pw_kernel(%arg0: memref<4x256xf32, #tpu.memory_space<vmem>>, %arg1: memref<1x128xf32, #tpu.memory_space<vmem>>, %arg2: memref<4x5xf32, #tpu.memory_space<vmem>>, %arg3: memref<8x5xf32, #tpu.memory_space<vmem>>, %arg4: memref<8x128xf32, #tpu.memory_space<vmem>>) attributes {dimension_semantics = [], scalar_prefetch = 0 : i64, scratch_operands = 0 : i64, tpu.core_type = #tpu.core_type<tc>} {
    %c0 = arith.constant 0 : index
    %c0_0 = arith.constant 0 : index
    %0 = vector.load %arg0[%c0, %c0_0] : memref<4x256xf32, #tpu.memory_space<vmem>>, vector<4x256xf32>
    %c0_1 = arith.constant 0 : index
    %c0_2 = arith.constant 0 : index
    %1 = vector.load %arg1[%c0_1, %c0_2] : memref<1x128xf32, #tpu.memory_space<vmem>>, vector<1x128xf32>
    %c0_3 = arith.constant 0 : index
    %c0_4 = arith.constant 0 : index
    %2 = vector.load %arg2[%c0_3, %c0_4] : memref<4x5xf32, #tpu.memory_space<vmem>>, vector<4x5xf32>
    %c0_5 = arith.constant 0 : index
    %c0_6 = arith.constant 0 : index
    %3 = vector.load %arg3[%c0_5, %c0_6] : memref<8x5xf32, #tpu.memory_space<vmem>>, vector<8x5xf32>
    %4 = vector.extract_strided_slice %0 {offsets = [0, 0], sizes = [4, 128], strides = [1, 1]} : vector<4x256xf32> to vector<4x128xf32>
    %5 = vector.extract_strided_slice %2 {offsets = [0, 0], sizes = [4, 1], strides = [1, 1]} : vector<4x5xf32> to vector<4x1xf32>
    %6 = vector.broadcast %5 : vector<4x1xf32> to vector<4x128xf32>
    %7 = arith.mulf %4, %6 : vector<4x128xf32>
    %8 = vector.extract_strided_slice %0 {offsets = [0, 1], sizes = [4, 128], strides = [1, 1]} : vector<4x256xf32> to vector<4x128xf32>
    %9 = vector.extract_strided_slice %2 {offsets = [0, 1], sizes = [4, 1], strides = [1, 1]} : vector<4x5xf32> to vector<4x1xf32>
    %10 = vector.broadcast %9 : vector<4x1xf32> to vector<4x128xf32>
    %11 = arith.mulf %8, %10 : vector<4x128xf32>
    %12 = arith.addf %7, %11 : vector<4x128xf32>
    %13 = vector.extract_strided_slice %0 {offsets = [0, 2], sizes = [4, 128], strides = [1, 1]} : vector<4x256xf32> to vector<4x128xf32>
    %14 = vector.extract_strided_slice %2 {offsets = [0, 2], sizes = [4, 1], strides = [1, 1]} : vector<4x5xf32> to vector<4x1xf32>
    %15 = vector.broadcast %14 : vector<4x1xf32> to vector<4x128xf32>
    %16 = arith.mulf %13, %15 : vector<4x128xf32>
    %17 = arith.addf %12, %16 : vector<4x128xf32>
    %18 = vector.broadcast %1 : vector<1x128xf32> to vector<4x128xf32>
    %19 = arith.mulf %17, %18 : vector<4x128xf32>
    %cst = arith.constant dense<0.000000e+00> : vector<4xf32>
    %20 = vector.multi_reduction <add>, %19, %cst [1] : vector<4x128xf32> to vector<4xf32>
    %21 = vector.shape_cast %20 : vector<4xf32> to vector<4x1xf32>
    %22 = arith.mulf %19, %19 : vector<4x128xf32>
    %cst_7 = arith.constant dense<0.000000e+00> : vector<4xf32>
    %23 = vector.multi_reduction <add>, %22, %cst_7 [1] : vector<4x128xf32> to vector<4xf32>
    %24 = vector.shape_cast %23 : vector<4xf32> to vector<4x1xf32>
    %cst_8 = arith.constant 3.125000e-02 : f32
    %25 = vector.broadcast %cst_8 : f32 to vector<4x1xf32>
    %26 = arith.mulf %21, %25 : vector<4x1xf32>
    %cst_9 = arith.constant 3.125000e-02 : f32
    %27 = vector.broadcast %cst_9 : f32 to vector<4x1xf32>
    %28 = arith.mulf %24, %27 : vector<4x1xf32>
    %29 = arith.mulf %26, %26 : vector<4x1xf32>
    %30 = arith.subf %28, %29 : vector<4x1xf32>
    %31 = vector.extract_strided_slice %2 {offsets = [0, 3], sizes = [4, 1], strides = [1, 1]} : vector<4x5xf32> to vector<4x1xf32>
    %32 = vector.extract_strided_slice %2 {offsets = [0, 4], sizes = [4, 1], strides = [1, 1]} : vector<4x5xf32> to vector<4x1xf32>
    %cst_10 = arith.constant 9.99999974E-6 : f32
    %33 = vector.broadcast %cst_10 : f32 to vector<4x1xf32>
    %34 = arith.addf %30, %33 : vector<4x1xf32>
    %35 = math.rsqrt %34 : vector<4x1xf32>
    %36 = arith.mulf %31, %35 : vector<4x1xf32>
    %37 = arith.mulf %26, %36 : vector<4x1xf32>
    %38 = arith.subf %32, %37 : vector<4x1xf32>
    %39 = vector.broadcast %36 : vector<4x1xf32> to vector<4x128xf32>
    %40 = arith.mulf %19, %39 : vector<4x128xf32>
    %41 = vector.broadcast %38 : vector<4x1xf32> to vector<4x128xf32>
    %42 = arith.addf %40, %41 : vector<4x128xf32>
    %cst_11 = arith.constant 0.000000e+00 : f32
    %43 = vector.broadcast %cst_11 : f32 to vector<4x128xf32>
    %44 = arith.cmpf ogt, %42, %43 : vector<4x128xf32>
    %cst_12 = arith.constant 0.000000e+00 : f32
    %45 = vector.broadcast %cst_12 : f32 to vector<4x128xf32>
    %46 = arith.minimumf %42, %45 : vector<4x128xf32>
    %47 = math.exp %46 : vector<4x128xf32>
    %cst_13 = arith.constant 1.000000e+00 : f32
    %48 = vector.broadcast %cst_13 : f32 to vector<4x128xf32>
    %49 = arith.subf %47, %48 : vector<4x128xf32>
    %50 = arith.select %44, %42, %49 : vector<4x128xi1>, vector<4x128xf32>
    %51 = vector.extract_strided_slice %3 {offsets = [0, 0], sizes = [8, 4], strides = [1, 1]} : vector<8x5xf32> to vector<8x4xf32>
    %cst_14 = arith.constant dense<0.000000e+00> : vector<8x128xf32>
    %52 = tpu.matmul %51, %50, %cst_14 {dimension_numbers = #tpu.dot_dimension_numbers<[1], [0], [0], [1], [0, 0, 1, 1], [], []>} : vector<8x4xf32>, vector<4x128xf32>, vector<8x128xf32> -> vector<8x128xf32>
    %53 = vector.extract_strided_slice %3 {offsets = [0, 4], sizes = [8, 1], strides = [1, 1]} : vector<8x5xf32> to vector<8x1xf32>
    %54 = vector.broadcast %53 : vector<8x1xf32> to vector<8x128xf32>
    %55 = arith.addf %52, %54 : vector<8x128xf32>
    %c0_15 = arith.constant 0 : index
    %c0_16 = arith.constant 0 : index
    %56 = vector.load %arg4[%c0_15, %c0_16] : memref<8x128xf32, #tpu.memory_space<vmem>>, vector<8x128xf32>
    tpu.vector_store %arg4[%c0_15, %c0_16], %55 {strides = array<i32>} : memref<8x128xf32, #tpu.memory_space<vmem>>, vector<8x128xf32>,
    return
  }
}

</mosaic_0001>

<llo_original>
// kernel: tpu_custom_call.1
$region0: #{tpu_custom_call.1}
  #allocation0 [shape = 'u32[]', space=smem, size = 0x4, offset = 0x4, fixed_abs, tag = 'smem constant byte address 0x4 - core index']
  #allocation1 [shape = 'u32[144,128]{1,0:T(1,128)}', space=vmem, size = 0x12000, scoped, tag = 'internal scratch']
  %s0 = inlined_call_operand.hbm [shape: f32[4,256], index: 0, kind: input, shape index: {}]
  %s1 = inlined_call_operand.vmem [shape: f32[1,128], index: 1, kind: input, shape index: {}]
  %s2 = inlined_call_operand.hbm [shape: f32[4,5], index: 2, kind: input, shape index: {}]
  %s3 = inlined_call_operand.vmem [shape: f32[8,5], index: 3, kind: input, shape index: {}]
  %s4 = inlined_call_operand.hbm [shape: f32[8,128], index: 4, kind: output, shape index: {}]
  %s5 = sld [smem:[#allocation0]]
  $region34: #{tpu_custom_call.1} parent=0
    _
  %s7 = ssub.s32 1, %s5
  %s8 = scalar_select 0, %s7, %s5
  $region1: #{tpu_custom_call.1} parent=0
    #allocation2 [shape = 'u8[4096]{0}', space=vmem, size = 0x1000, scoped, tag = 'input window, operand 0, single buffered']
    #allocation3 [shape = 's32[1]{0}', space=sflag, size = 0x4, scoped, tag = 'scoped memory for tpu_custom_call.1']
    #allocation4 [shape = 's32[1]{0}', space=sflag, size = 0x4, scoped, tag = 'scoped memory for tpu_custom_call.1']
    #allocation5 [shape = 'u8[2048]{0}', space=vmem, size = 0x800, scoped, tag = 'input window, operand 2, single buffered']
    #allocation6 [shape = 's32[1]{0}', space=sflag, size = 0x4, scoped, tag = 'scoped memory for tpu_custom_call.1']
    #allocation7 [shape = 'u8[4096]{0}', space=vmem, size = 0x1000, scoped, tag = 'output window, operand 0, single buffered']
    %9 = vsyncpa [#allocation3], 0
    %10 = vsyncpa [#allocation6], 0
    %11 = vsyncpa [#allocation4], 0
    // Predicated region
    $region2: #{tpu_custom_call.1} parent=1 // pred_check
      _
    $region3: #{tpu_custom_call.1} parent=1 // pred_check_branch
      %13 = sbr.rel (0) target = $region5
    $region4: #{tpu_custom_call.1} parent=1 // pred_region
      %s15 = ssub.s32 128, 128
      %16 = vsyncadd [#allocation3], %s15
      %s18 = sshll.u32 [#allocation2], 4
      %s19 = int_to_ptr.vmem [resolvable:$true] %s18
      %21 = dma.hbm_to_vmem [thread:$0]  %s0, 128, %s19, [#allocation3]
    $region5: #{tpu_custom_call.1} parent=1 // pred_fallthru
      _
    // Predicated region
    $region6: #{tpu_custom_call.1} parent=1 // pred_check
      _
    $region7: #{tpu_custom_call.1} parent=1 // pred_check_branch
      %23 = sbr.rel (0) target = $region9
    $region8: #{tpu_custom_call.1} parent=1 // pred_region
      _
    $region9: #{tpu_custom_call.1} parent=1 // pred_fallthru
      _
    // Predicated region
    $region10: #{tpu_custom_call.1} parent=1 // pred_check
      _
    $region11: #{tpu_custom_call.1} parent=1 // pred_check_branch
      %25 = sbr.rel (0) target = $region13
    $region12: #{tpu_custom_call.1} parent=1 // pred_region
      %s27 = ssub.s32 64, 64
      %28 = vsyncadd [#allocation6], %s27
      %s30 = sshll.u32 [#allocation5], 4
      %s31 = int_to_ptr.vmem [resolvable:$true] %s30
      %33 = dma.hbm_to_vmem [thread:$0]  %s2, 64, %s31, [#allocation6]
    $region13: #{tpu_custom_call.1} parent=1 // pred_fallthru
      _
    // Predicated region
    $region14: #{tpu_custom_call.1} parent=1 // pred_check
      _
    $region15: #{tpu_custom_call.1} parent=1 // pred_check_branch
      %35 = sbr.rel (0) target = $region17
    $region16: #{tpu_custom_call.1} parent=1 // pred_region
      _
    $region17: #{tpu_custom_call.1} parent=1 // pred_fallthru
      _
    // Predicated region
    $region18: #{tpu_custom_call.1} parent=1 // pred_check
      _
    $region19: #{tpu_custom_call.1} parent=1 // pred_check_branch
      %37 = sbr.rel (0) target = $region21
    $region20: #{tpu_custom_call.1} parent=1 // pred_region
      %38 = dma.done [#allocation3], 128
    $region21: #{tpu_custom_call.1} parent=1 // pred_fallthru
      _
    // Predicated region
    $region22: #{tpu_custom_call.1} parent=1 // pred_check
      _
    $region23: #{tpu_custom_call.1} parent=1 // pred_check_branch
      %40 = sbr.rel (0) target = $region25
    $region24: #{tpu_custom_call.1} parent=1 // pred_region
      %41 = dma.done [#allocation6], 64
    $region25: #{tpu_custom_call.1} parent=1 // pred_fallthru
      _
    %v42 = vld [vmem:[#allocation2] sm:$0xff]
    %v43 = vld [vmem:[%s1] sm:$0x1]
    %v44 = vld [vmem:[#allocation5] sm:$0xf]
    %v45 = vld [vmem:[%s3] sm:$0xff]
    %47 = vset.pattern.permute.xlu0 0
    %48 = vperm.xlu0 %47, %v44
    %v49 = vpop.permute.xlu0 %48
    %v51 = vmul.f32 %v42, %v49
    %52 = vset.pattern.permute.xlu0 1
    %53 = vperm.xlu0 %52, %v44
    %v54 = vpop.permute.xlu0 %53
    %v56 = vmul.f32 %v42, %v54
    %58 = vrot.lane.b32.xlu0 %v56, 127
    %v59 = vpop.permute.xlu0 %58
    %v60 = vrot.slane %v59, 4
    %vm61 = vcmask 1039360
    %v62 = vsel %vm61, %v59, %v60
    %v64 = vadd.f32 %v51, %v62
    %65 = vset.pattern.permute.xlu0 2
    %66 = vperm.xlu0 %65, %v44
    %v67 = vpop.permute.xlu0 %66
    %v69 = vmul.f32 %v42, %v67
    %71 = vrot.lane.b32.xlu0 %v69, 126
    %v72 = vpop.permute.xlu0 %71
    %v73 = vrot.slane %v72, 4
    %vm74 = vcmask 1031168
    %v75 = vsel %vm74, %v72, %v73
    %v77 = vadd.f32 %v64, %v75
    %v79 = vlaneseq
    %v80 = vshrl.u32 %v79, 7
    %v81 = vsub.s32 0, %v80
    %v82 = vrot.slane %v43, %v81
    %v84 = vmul.f32 %v77, %v82
    %vm85 = vcmask 1043456
    %v86 = vsel %vm85, %v84, 0.0
    %87 = vadd.xlane.f32.xlu0 %v86
    %v88 = vpop.xlane.xlu0 %87
    %v89 = vmul.f32 %v84, %v84
    %v90 = vsel %vm85, %v89, 0.0
    %91 = vadd.xlane.f32.xlu0 %v90
    %v92 = vpop.xlane.xlu0 %91
    %v93 = vmul.f32 %v88, 0.03125
    %v94 = vmul.f32 %v92, 0.03125
    %v95 = vmul.f32 %v93, %v93
    %v96 = vsub.f32 %v94, %v95
    %v97 = vadd.f32 %v96, 1e-05
    %v98 = vrsqrt.pop %v97
    %v99 = vmul.f32 %v44, %v98
    %v100 = vmul.f32 %v93, %v99
    %102 = vrot.lane.b32.xlu0 %v100, 1
    %v103 = vpop.permute.xlu0 %102
    %v105 = vsub.f32 %v44, %v103
    %107 = vset.pattern.permute.xlu0 3
    %108 = vperm.xlu0 %107, %v99
    %v109 = vpop.permute.xlu0 %108
    %v111 = vmul.f32 %v84, %v109
    %113 = vset.pattern.permute.xlu0 4
    %114 = vperm.xlu0 %113, %v105
    %v115 = vpop.permute.xlu0 %114
    %v117 = vadd.f32 %v111, %v115
    %vm118 = vcmp.gt.f32.partialorder %v117, 0.0
    %v119 = vmin.f32 %v117, 0.0
    %v120 = vmul.f32 %v119, 1.442695
    %v121 = vpow.pop %v120
    %v122 = vsub.f32 %v121, 1.0
    %v123 = vsel %vm118, %v117, %v122
    %125 = vset.pattern.permute.xlu0 4
    %126 = vperm.xlu0 %125, %v45
    %v127 = vpop.permute.xlu0 %126
    %vm129 = vcmask 31744
    %v130 = vsel %vm129, %v45, 0
    %v133 = vsel %vm85, %v123, 0
    %135 = vmatprep.subr.mxu0 0.0
    %136 = vmatpush1.msra.mxu0 %v133
    %137 = vmatprep.subr.mxu0 0.0
    %138 = vmatpush1.msra.mxu0 0.0
    %139 = vmatprep.subr.mxu0 0.0
    %140 = vmatpush1.msra.mxu0 0.0
    %141 = vmatprep.subr.mxu0 0.0
    %142 = vmatpush1.msra.mxu0 0.0
    %143 = vmatprep.subr.mxu0 0.0
    %144 = vmatpush1.msra.mxu0 0.0
    %145 = vmatprep.subr.mxu0 0.0
    %146 = vmatpush1.msra.mxu0 0.0
    %147 = vmatprep.subr.mxu0 0.0
    %148 = vmatpush1.msra.mxu0 0.0
    %149 = vmatprep.subr.mxu0 0.0
    %150 = vmatpush1.msra.mxu0 0.0
    %151 = vmatprep.subr.mxu0 0.0
    %152 = vmatpush1.msra.mxu0 0.0
    %153 = vmatprep.subr.mxu0 0.0
    %154 = vmatpush1.msra.mxu0 0.0
    %155 = vmatprep.subr.mxu0 0.0
    %156 = vmatpush1.msra.mxu0 0.0
    %157 = vmatprep.subr.mxu0 0.0
    %158 = vmatpush1.msra.mxu0 0.0
    %159 = vmatprep.subr.mxu0 0.0
    %160 = vmatpush1.msra.mxu0 0.0
    %161 = vmatprep.subr.mxu0 0.0
    %162 = vmatpush1.msra.mxu0 0.0
    %163 = vmatprep.subr.mxu0 0.0
    %164 = vmatpush1.msra.mxu0 0.0
    %165 = vmatprep.subr.mxu0 0.0
    %166 = vmatpush1.msra.mxu0 0.0
    %167 = vmatprep.subr.mxu0 0.0
    %168 = vmatpush1.msra.mxu0 0.0
    %169 = vmatprep.subr.mxu0 0.0
    %170 = vmatpush1.msra.mxu0 0.0
    %171 = vmatprep.subr.mxu0 0.0
    %172 = vmatpush1.msra.mxu0 0.0
    %173 = vmatprep.subr.mxu0 0.0
    %174 = vmatpush1.msra.mxu0 0.0
    %175 = vmatprep.subr.mxu0 0.0
    %176 = vmatpush1.msra.mxu0 0.0
    %177 = vmatprep.subr.mxu0 0.0
    %178 = vmatpush1.msra.mxu0 0.0
    %179 = vmatprep.subr.mxu0 0.0
    %180 = vmatpush1.msra.mxu0 0.0
    %181 = vmatprep.subr.mxu0 0.0
    %182 = vmatpush1.msra.mxu0 0.0
    %183 = vmatprep.subr.mxu0 0.0
    %184 = vmatpush1.msra.mxu0 0.0
    %185 = vmatprep.subr.mxu0 0.0
    %186 = vmatpush1.msra.mxu0 0.0
    %187 = vmatprep.subr.mxu0 0.0
    %188 = vmatpush1.msra.mxu0 0.0
    %189 = vmatprep.subr.mxu0 0.0
    %190 = vmatpush1.msra.mxu0 0.0
    %191 = vmatprep.subr.mxu0 0.0
    %192 = vmatpush1.msra.mxu0 0.0
    %193 = vmatprep.subr.mxu0 0.0
    %194 = vmatpush1.msra.mxu0 0.0
    %195 = vmatprep.subr.mxu0 0.0
    %196 = vmatpush1.msra.mxu0 0.0
    %197 = vmatprep.subr.mxu0 0.0
    %198 = vmatpush1.msra.mxu0 0.0
    %199 = vmatprep.mubr.f32.mxu0 0.0
    %200 = vmatmul.mubr.f32.gmra.mrb[0].mxu0 %v130
    %v201 = vpop.f32.mrb[0].mxu0
    %v202 = vadd.f32 %v127, %v201
    %v203 = vpop.f32.mrb[0].mxu0
    %204 = vdwg.mxu0
    %205 = vst [vmem:[#allocation7] sm:$0xff] %v202
    // Predicated region
    $region26: #{tpu_custom_call.1} parent=1 // pred_check
      _
    $region27: #{tpu_custom_call.1} parent=1 // pred_check_branch
      %207 = sbr.rel (0) target = $region29
    $region28: #{tpu_custom_call.1} parent=1 // pred_region
      %s209 = ssub.s32 128, 128
      %210 = vsyncadd [#allocation4], %s209
      %s212 = sshll.u32 [#allocation7], 4
      %s213 = int_to_ptr.vmem [resolvable:$true] %s212
      %215 = dma.vmem_to_hbm [thread:$0]  %s213, 128, %s4, [#allocation4]
    $region29: #{tpu_custom_call.1} parent=1 // pred_fallthru
      _
    // Predicated region
    $region30: #{tpu_custom_call.1} parent=1 // pred_check
      _
    $region31: #{tpu_custom_call.1} parent=1 // pred_check_branch
      %217 = sbr.rel (0) target = $region33
    $region32: #{tpu_custom_call.1} parent=1 // pred_region
      %218 = dma.done [#allocation4], 128
    $region33: #{tpu_custom_call.1} parent=1 // pred_fallthru
      _
    %219 = vsyncpa [#allocation3], 1
    %220 = vsyncpa [#allocation6], 1
    %221 = vsyncpa [#allocation4], 1

</llo_original>
